<compile_context>
chip_gen: v7x
topology: tpu7x:2x2x1
jax: 0.10.0
libtpu: 0.0.40
codegen_flags: <defaults>
</compile_context>

<pallas_src>
import functools

import jax
import jax.numpy as jnp
from jax import lax
from jax.experimental import pallas as pl
from jax.experimental.pallas import tpu as pltpu


def _mlp_proj_kernel_acc(x_ref, w_ref, b_ref, o_ref, acc_ref):
    # x_ref:   (1, tk, tm)  slice of x viewed as (B, C, N)   (channels-major)
    # w_ref:   (tk, tn)     slice of the (C, E) projection weight
    # b_ref:   (1, tn)      bias slice
    # o_ref:   (1, tm, tn)  output slice of (B, N, E)
    # acc_ref: (tm, tn)     f32 accumulator, resident across the K grid axis
    k = pl.program_id(3)

    @pl.when(k == 0)
    def _init():
        acc_ref[...] = jnp.zeros_like(acc_ref)

    # Contract the channel axis (dim 0 of both tiles).  The MXU consumes the
    # transposed LHS directly, so the flatten(2).transpose(1,2) of the PyTorch
    # forward is folded into the index mapping instead of an HBM round trip.
    acc_ref[...] += lax.dot_general(
        x_ref[0], w_ref[...],
        dimension_numbers=(((0,), (0,)), ((), ())),
        preferred_element_type=jnp.float32)

    @pl.when(k == pl.num_programs(3) - 1)
    def _finalize():
        o_ref[0] = (acc_ref[...] + b_ref[...]).astype(o_ref.dtype)


def _mlp_proj_kernel_single_k(x_ref, w_ref, b_ref, o_ref):
    # Fast path: whole channel axis in one tile -> write output directly,
    # no scratch accumulator, no zero-init, no extra VMEM copy.
    acc = lax.dot_general(
        x_ref[0], w_ref[...],
        dimension_numbers=(((0,), (0,)), ((), ())),
        preferred_element_type=jnp.float32)
    o_ref[0] = (acc + b_ref[...]).astype(o_ref.dtype)


def _pick_tile(dim, pref, quantum):
    """Largest tile <= pref that divides `dim` and is a multiple of `quantum`;
    falls back to the full dim (a full-extent block is always legal)."""
    if dim <= pref:
        return dim
    if dim % quantum == 0:
        t = (pref // quantum) * quantum
        while t >= quantum:
            if dim % t == 0:
                return t
            t -= quantum
    return dim


@functools.partial(jax.jit, static_argnames=("tm_pref", "tn_pref", "tk_pref"))
def mlp_forward(x_nchw, weight, bias, *, tm_pref=512, tn_pref=512, tk_pref=1024):
    """x_nchw: (B, C, H, W); weight: (E, C) (PyTorch nn.Linear layout); bias: (E,).

    Returns (B, H*W, E), matching MLP.forward.
    """
    B, C, H, W = x_nchw.shape
    E = weight.shape[0]
    N = H * W

    x_cn = x_nchw.reshape(B, C, N)   # contiguous-dim reshape: free, no transpose
    w_ce = jnp.transpose(weight)     # (C, E): tiny one-time weight relayout
    b_row = bias.reshape(1, E)

    tm = _pick_tile(N, tm_pref, 128)   # token tile (lane axis of the x block)
    tn = _pick_tile(E, tn_pref, 128)   # embed tile (lane-dense output/accumulator)
    tk = _pick_tile(C, tk_pref, 8)     # channel (reduction) tile
    # TODO(synk): if N or E is large and not a multiple of 128, tile with
    # padding/masking instead of falling back to a full-extent block.

    nk = C // tk

    if nk == 1:
        # Single reduction step: no resident accumulator needed.
        grid = (B, N // tm, E // tn)
        grid_spec = pltpu.PrefetchScalarGridSpec(
            num_scalar_prefetch=0,
            grid=grid,
            in_specs=[
                pl.BlockSpec((1, C, tm), lambda b, i, j: (b, 0, i)),
                pl.BlockSpec((C, tn), lambda b, i, j: (0, j)),
                pl.BlockSpec((1, tn), lambda b, i, j: (0, j)),
            ],
            out_specs=pl.BlockSpec((1, tm, tn), lambda b, i, j: (b, i, j)),
            scratch_shapes=[],
        )
        kernel = _mlp_proj_kernel_single_k
        dims = ("parallel", "parallel", "parallel")
    else:
        grid = (B, N // tm, E // tn, nk)
        grid_spec = pltpu.PrefetchScalarGridSpec(
            num_scalar_prefetch=0,
            grid=grid,
            in_specs=[
                pl.BlockSpec((1, tk, tm), lambda b, i, j, k: (b, k, i)),
                pl.BlockSpec((tk, tn), lambda b, i, j, k: (k, j)),
                pl.BlockSpec((1, tn), lambda b, i, j, k: (0, j)),
            ],
            out_specs=pl.BlockSpec((1, tm, tn), lambda b, i, j, k: (b, i, j)),
            scratch_shapes=[pltpu.VMEM((tm, tn), jnp.float32)],
        )
        kernel = _mlp_proj_kernel_acc
        dims = ("parallel", "parallel", "parallel", "arbitrary")

    return pl.pallas_call(
        kernel,
        out_shape=jax.ShapeDtypeStruct((B, N, E), x_nchw.dtype),
        grid_spec=grid_spec,
        compiler_params=pltpu.CompilerParams(dimension_semantics=dims),
    )(x_cn, w_ce, b_row)


def _reference(x_nchw, weight, bias):
    B, C, H, W = x_nchw.shape
    x_tok = jnp.transpose(x_nchw.reshape(B, C, H * W), (0, 2, 1))   # (B, N, C)
    return jnp.einsum("bnc,ec->bne", x_tok, weight) + bias


if __name__ == "__main__":
    key = jax.random.PRNGKey(0)

    # --- Case 1: small shapes, single reduction step (fast path) -------------
    B, C, H, W, E = 2, 32, 16, 16, 128
    k1, k2, k3, key = jax.random.split(key, 4)
    x = jax.random.normal(k1, (B, C, H, W), dtype=jnp.float32)
    weight = jax.random.normal(k2, (E, C), dtype=jnp.float32) * 0.05
    bias = jax.random.normal(k3, (E,), dtype=jnp.float32) * 0.05

    out = jax.block_until_ready(mlp_forward(x, weight, bias))
    ref = _reference(x, weight, bias)
    assert out.shape == (B, H * W, E)
    assert jnp.allclose(out, ref, atol=1e-4, rtol=1e-4)

    # --- Case 2: force a multi-step reduction (accumulator path) -------------
    B2, C2, H2, W2, E2 = 2, 256, 8, 8, 256
    k1, k2, k3, key = jax.random.split(key, 4)
    x2 = jax.random.normal(k1, (B2, C2, H2, W2), dtype=jnp.float32)
    w2 = jax.random.normal(k2, (E2, C2), dtype=jnp.float32) * 0.05
    b2 = jax.random.normal(k3, (E2,), dtype=jnp.float32) * 0.05

    out2 = jax.block_until_ready(mlp_forward(x2, w2, b2, tk_pref=128))
    ref2 = _reference(x2, w2, b2)
    assert out2.shape == (B2, H2 * W2, E2)
    assert jnp.allclose(out2, ref2, atol=1e-4, rtol=1e-4)

    print("KERNEL_OK")
</pallas_src>

<mosaic_0001>
module attributes {stable_mosaic.version = 11 : i64} {
  func.func @_mlp_proj_kernel_single_k(%arg0: i32, %arg1: i32, %arg2: i32, %arg3: memref<1x32x256xf32, #tpu.memory_space<vmem>>, %arg4: memref<32x128xf32, #tpu.memory_space<vmem>>, %arg5: memref<1x128xf32, #tpu.memory_space<vmem>>, %arg6: memref<1x256x128xf32, #tpu.memory_space<vmem>>) attributes {dimension_semantics = [#tpu.dimension_semantics<parallel>, #tpu.dimension_semantics<parallel>, #tpu.dimension_semantics<parallel>], iteration_bounds = array<i64: 2, 1, 1>, scalar_prefetch = 0 : i64, scratch_operands = 0 : i64, tpu.core_type = #tpu.core_type<tc>, window_params = [{transform_indices = @transform_0, window_bounds = array<i64: 1, 32, 256>}, {transform_indices = @transform_1, window_bounds = array<i64: 32, 128>}, {transform_indices = @transform_2, window_bounds = array<i64: 1, 128>}, {transform_indices = @transform_3, window_bounds = array<i64: 1, 256, 128>}]} {
    %c0 = arith.constant 0 : index
    %c0_0 = arith.constant 0 : index
    %c0_1 = arith.constant 0 : index
    %0 = vector.load %arg3[%c0, %c0_0, %c0_1] : memref<1x32x256xf32, #tpu.memory_space<vmem>>, vector<1x32x256xf32>
    %1 = vector.shape_cast %0 : vector<1x32x256xf32> to vector<32x256xf32>
    %c0_2 = arith.constant 0 : index
    %c0_3 = arith.constant 0 : index
    %2 = vector.load %arg4[%c0_2, %c0_3] : memref<32x128xf32, #tpu.memory_space<vmem>>, vector<32x128xf32>
    %cst = arith.constant dense<0.000000e+00> : vector<256x128xf32>
    %3 = tpu.matmul %1, %2, %cst {dimension_numbers = #tpu.dot_dimension_numbers<[0], [0], [1], [1], [0, 1, 1, 1], [], []>} : vector<32x256xf32>, vector<32x128xf32>, vector<256x128xf32> -> vector<256x128xf32>
    %c0_4 = arith.constant 0 : index
    %c0_5 = arith.constant 0 : index
    %4 = vector.load %arg5[%c0_4, %c0_5] : memref<1x128xf32, #tpu.memory_space<vmem>>, vector<1x128xf32>
    %5 = vector.broadcast %4 : vector<1x128xf32> to vector<256x128xf32>
    %6 = arith.addf %3, %5 : vector<256x128xf32>
    %c0_6 = arith.constant 0 : index
    %c0_7 = arith.constant 0 : index
    %c0_8 = arith.constant 0 : index
    %7 = vector.load %arg6[%c0_6, %c0_7, %c0_8] : memref<1x256x128xf32, #tpu.memory_space<vmem>>, vector<1x256x128xf32>
    %8 = vector.shape_cast %7 : vector<1x256x128xf32> to vector<256x128xf32>
    %9 = vector.shape_cast %6 : vector<256x128xf32> to vector<1x256x128xf32>
    tpu.vector_store %arg6[%c0_6, %c0_7, %c0_8], %9 {strides = array<i32>} : memref<1x256x128xf32, #tpu.memory_space<vmem>>, vector<1x256x128xf32>,
    return
  }
  func.func @transform_0(%arg0: i32, %arg1: i32, %arg2: i32) -> (i32, i32, i32) {
    %c0_i32 = arith.constant 0 : i32
    %c0_i32_0 = arith.constant 0 : i32
    return %arg0, %c0_i32, %arg1 : i32, i32, i32
  }
  func.func @transform_1(%arg0: i32, %arg1: i32, %arg2: i32) -> (i32, i32) {
    %c0_i32 = arith.constant 0 : i32
    %c0_i32_0 = arith.constant 0 : i32
    return %c0_i32, %arg2 : i32, i32
  }
  func.func @transform_2(%arg0: i32, %arg1: i32, %arg2: i32) -> (i32, i32) {
    %c0_i32 = arith.constant 0 : i32
    %c0_i32_0 = arith.constant 0 : i32
    return %c0_i32, %arg2 : i32, i32
  }
  func.func @transform_3(%arg0: i32, %arg1: i32, %arg2: i32) -> (i32, i32, i32) {
    %c0_i32 = arith.constant 0 : i32
    return %arg0, %arg1, %arg2 : i32, i32, i32
  }
}

</mosaic_0001>

<llo_original>
// kernel: mlp_forward.1
$region0: #{mlp_forward.1}
  #allocation0 [shape = 'u32[]', space=smem, size = 0x4, offset = 0x4, fixed_abs, tag = 'smem constant byte address 0x4 - core index']
  #allocation1 [shape = 'u32[144,128]{1,0:T(1,128)}', space=vmem, size = 0x12000, scoped, tag = 'internal scratch']
  %s0 = inlined_call_operand.vmem [shape: f32[2,32,256], index: 0, kind: input, shape index: {}]
  %s1 = inlined_call_operand.vmem [shape: f32[32,128], index: 1, kind: input, shape index: {}]
  %s2 = inlined_call_operand.vmem [shape: f32[1,128], index: 2, kind: input, shape index: {}]
  %s3 = inlined_call_operand.hbm [shape: f32[2,256,128], index: 3, kind: output, shape index: {}]
  %s4 = sld [smem:[#allocation0]]
  $region45: #{mlp_forward.1} parent=0
    _
  %s6 = ssub.s32 1, %s4
  %s7 = scalar_select 0, %s6, %s4
  $region1: #{mlp_forward.1} parent=0
    #allocation2 [shape = 'u8[262144]{0}', space=vmem, size = 0x40000, scoped, tag = 'output window, operand 0']
    #allocation3 [shape = 's32[2]{0}', space=sflag, size = 0x8, scoped, tag = 'scoped memory for mlp_forward.1']
    %8 = vsyncpa [#allocation3], 0
    %s9 = scalar_lea.sflag [#allocation3], 1
    %10 = vsyncpa %s9, 0
    loop: start=0, step=1, limit=4
    $region2: #{mlp_forward.1} parent=1 // loop_pre_header
      _
    $region3: #{mlp_forward.1} parent=1 // loop_header
      %s12 = sphi 0, %s16
      %p13 = scmp.ge.s32.totalorder %s12, 4
      %s19 = sphi 0, %s38
      %s20 = sphi 0, %s34
      %s21 = sphi 0, %s30
      %s22 = sphi 0, %s19
      %s23 = sphi 0, %s20
      %s24 = sphi 0, %s21
      %s25 = sphi 0, %s22
      %s26 = sphi 0, %s23
      %s27 = sphi 0, %s24
      %s43 = sphi 0, %s45
      %s46 = sphi 0, %s43
      %s47 = sphi 0, %s46
      %s63 = sphi 0, %s47
      %s69 = sphi 0, %s71
      %s72 = sphi 0, %s69
      %s73 = sphi 0, %s72
      %s89 = sphi 0, %s73
      %s95 = sphi 0, %s97
      %s98 = sphi 0, %s95
      %s99 = sphi 0, %s98
      %s115 = sphi 0, %s99
      %s125 = sphi 0, %s127
      %s128 = sphi 0, %s125
      %s129 = sphi 0, %s128
      %s145 = sphi 0, %s129
    $region4: #{mlp_forward.1} parent=1 // loop_header_branch
      %15 = sbr.rel (%p13) target = $region8
    $region5: #{mlp_forward.1} parent=1 // loop_body
      %s17 = ssub.s32 %s12, 1
      %s18 = ssub.s32 %s12, 2
      %s28 = sadd.s32 1, %s21
      %p29 = scmp.ge.s32.totalorder %s28, 1
      %s30 = scalar_select %p29, 0, %s28
      %s31 = sadd.s32 1, %s20
      %s32 = scalar_select %p29, %s31, %s20
      %p33 = scmp.ge.s32.totalorder %s32, 1
      %s34 = scalar_select %p33, 0, %s32
      %s35 = sadd.s32 1, %s19
      %s36 = scalar_select %p33, %s35, %s19
      %p37 = scmp.ge.s32.totalorder %s36, 2
      %s38 = scalar_select %p37, 0, %s36
      %s39 = ssub.s32 %s19, %s38
      %s40 = ssub.s32 %s20, %s34
      %s41 = sor.u32 %s39, %s40
      %p42 = scmp.eq.s32.totalorder %s41, 0
      %s44 = sadd.s32 %s43, 1
      %s45 = scalar_select %p42, %s43, %s44
      %p48 = pneg %p42
      %p49 = scmp.eq.s32.totalorder %s12, 1
      %p50 = por %p48, %p49
      %p51 = scmp.ne.s32.totalorder %s43, %s46
      %p52 = scmp.eq.s32.totalorder %s12, 0
      %p53 = por %p51, %p52
      %p54 = scmp.ne.s32.totalorder %s43, %s46
      %p55 = scmp.eq.s32.totalorder %s17, 1
      %p56 = por %p54, %p55
      %p57 = scmp.ne.s32.totalorder %s46, %s47
      %p58 = scmp.eq.s32.totalorder %s17, 0
      %p59 = por %p57, %p58
      %p60 = scmp.ne.s32.totalorder %s46, %s47
      %p61 = scmp.eq.s32.totalorder %s18, 1
      %p62 = por %p60, %p61
      %p64 = scmp.ne.s32.totalorder %s47, %s63
      %p65 = scmp.eq.s32.totalorder %s18, 0
      %p66 = por %p64, %p65
      %s67 = ssub.s32 %s21, %s30
      %p68 = scmp.eq.s32.totalorder %s67, 0
      %s70 = sadd.s32 %s69, 1
      %s71 = scalar_select %p68, %s69, %s70
      %p74 = pneg %p68
      %p75 = scmp.eq.s32.totalorder %s12, 1
      %p76 = por %p74, %p75
      %p77 = scmp.ne.s32.totalorder %s69, %s72
      %p78 = scmp.eq.s32.totalorder %s12, 0
      %p79 = por %p77, %p78
      %p80 = scmp.ne.s32.totalorder %s69, %s72
      %p81 = scmp.eq.s32.totalorder %s17, 1
      %p82 = por %p80, %p81
      %p83 = scmp.ne.s32.totalorder %s72, %s73
      %p84 = scmp.eq.s32.totalorder %s17, 0
      %p85 = por %p83, %p84
      %p86 = scmp.ne.s32.totalorder %s72, %s73
      %p87 = scmp.eq.s32.totalorder %s18, 1
      %p88 = por %p86, %p87
      %p90 = scmp.ne.s32.totalorder %s73, %s89
      %p91 = scmp.eq.s32.totalorder %s18, 0
      %p92 = por %p90, %p91
      %s93 = ssub.s32 %s21, %s30
      %p94 = scmp.eq.s32.totalorder %s93, 0
      %s96 = sadd.s32 %s95, 1
      %s97 = scalar_select %p94, %s95, %s96
      %p100 = pneg %p94
      %p101 = scmp.eq.s32.totalorder %s12, 1
      %p102 = por %p100, %p101
      %p103 = scmp.ne.s32.totalorder %s95, %s98
      %p104 = scmp.eq.s32.totalorder %s12, 0
      %p105 = por %p103, %p104
      %p106 = scmp.ne.s32.totalorder %s95, %s98
      %p107 = scmp.eq.s32.totalorder %s17, 1
      %p108 = por %p106, %p107
      %p109 = scmp.ne.s32.totalorder %s98, %s99
      %p110 = scmp.eq.s32.totalorder %s17, 0
      %p111 = por %p109, %p110
      %p112 = scmp.ne.s32.totalorder %s98, %s99
      %p113 = scmp.eq.s32.totalorder %s18, 1
      %p114 = por %p112, %p113
      %p116 = scmp.ne.s32.totalorder %s99, %s115
      %p117 = scmp.eq.s32.totalorder %s18, 0
      %p118 = por %p116, %p117
      %s119 = ssub.s32 %s19, %s38
      %s120 = ssub.s32 %s20, %s34
      %s121 = sor.u32 %s119, %s120
      %s122 = ssub.s32 %s21, %s30
      %s123 = sor.u32 %s121, %s122
      %p124 = scmp.eq.s32.totalorder %s123, 0
      %s126 = sadd.s32 %s125, 1
      %s127 = scalar_select %p124, %s125, %s126
      %p130 = pneg %p124
      %p131 = scmp.eq.s32.totalorder %s12, 1
      %p132 = por %p130, %p131
      %p133 = scmp.ne.s32.totalorder %s125, %s128
      %p134 = scmp.eq.s32.totalorder %s12, 0
      %p135 = por %p133, %p134
      %p136 = scmp.ne.s32.totalorder %s125, %s128
      %p137 = scmp.eq.s32.totalorder %s17, 1
      %p138 = por %p136, %p137
      %p139 = scmp.ne.s32.totalorder %s128, %s129
      %p140 = scmp.eq.s32.totalorder %s17, 0
      %p141 = por %p139, %p140
      %p142 = scmp.ne.s32.totalorder %s128, %s129
      %p143 = scmp.eq.s32.totalorder %s18, 1
      %p144 = por %p142, %p143
      %p146 = scmp.ne.s32.totalorder %s129, %s145
      %p147 = scmp.eq.s32.totalorder %s18, 0
      %p148 = por %p146, %p147
      %p149 = scmp.le.s32.totalorder 1, %s12
      %p150 = scmp.lt.s32.totalorder %s12, 3
      %p151 = pnand %p149, %p150
      %p152 = pneg %p151
      // Predicated region
      $region9: #{mlp_forward.1} parent=5 // pred_check
        _
      $region10: #{mlp_forward.1} parent=5 // pred_check_branch
        %154 = sbr.rel (%p151) target = $region12
      $region11: #{mlp_forward.1} parent=5 // pred_region
        %s155 = ssub.s32 %s12, 1
        // Predicated region
        $region13: #{mlp_forward.1} parent=11 // pred_check
          %p156 = pneg %p85
        $region14: #{mlp_forward.1} parent=11 // pred_check_branch
          %158 = sbr.rel (%p156) target = $region16
        $region15: #{mlp_forward.1} parent=11 // pred_region
          %p159 = scmp.lt.s32.totalorder %s24, 0
          %s160 = scalar_select %p159, %s24, 0
          %s161 = smul.addr %s160, 8
          %s162 = scalar_lea.vmem %s1, %s161
        $region16: #{mlp_forward.1} parent=11 // pred_fallthru
          _
        // Predicated region
        $region17: #{mlp_forward.1} parent=11 // pred_check
          %p163 = pneg %p111
        $region18: #{mlp_forward.1} parent=11 // pred_check_branch
          %165 = sbr.rel (%p163) target = $region20
        $region19: #{mlp_forward.1} parent=11 // pred_region
          %p166 = scmp.lt.s32.totalorder %s24, 0
          %s167 = scalar_select %p166, %s24, 0
          %s168 = scalar_lea.vmem %s2, %s167
        $region20: #{mlp_forward.1} parent=11 // pred_fallthru
          _
      $region12: #{mlp_forward.1} parent=5 // pred_fallthru
        _
      %p169 = scmp.lt.s32.totalorder %s12, 2
      // Predicated region
      $region21: #{mlp_forward.1} parent=5 // pred_check
        %p170 = pneg %p169
      $region22: #{mlp_forward.1} parent=5 // pred_check_branch
        %172 = sbr.rel (%p170) target = $region24
      $region23: #{mlp_forward.1} parent=5 // pred_region
        // Predicated region
        $region25: #{mlp_forward.1} parent=23 // pred_check
          %p173 = pneg %p53
        $region26: #{mlp_forward.1} parent=23 // pred_check_branch
          %175 = sbr.rel (%p173) target = $region28
        $region27: #{mlp_forward.1} parent=23 // pred_region
          %s176 = smul.u32 2, %s20
          %p177 = scmp.lt.s32.totalorder %s19, 1
          %s178 = scalar_select %p177, %s19, 1
          %p179 = scmp.lt.s32.totalorder %s176, 1
          %s180 = scalar_select %p179, %s176, 1
          %s181 = smul.addr %s178, 8
          %s182 = sadd.s32 %s180, %s181
          %s183 = smul.addr %s182, 8
          %s184 = scalar_lea.vmem %s0, %s183
          %s185 = smul.u32 2, %s20
        $region28: #{mlp_forward.1} parent=23 // pred_fallthru
          _
      $region24: #{mlp_forward.1} parent=5 // pred_fallthru
        _
      %p186 = scmp.le.s32.totalorder 1, %s12
      %p187 = scmp.lt.s32.totalorder %s12, 3
      %p188 = pnand %p186, %p187
      %p189 = pneg %p188
      // Predicated region
      $region29: #{mlp_forward.1} parent=5 // pred_check
        _
      $region30: #{mlp_forward.1} parent=5 // pred_check_branch
        %191 = sbr.rel (%p188) target = $region32
      $region31: #{mlp_forward.1} parent=5 // pred_region
        %s192 = ssub.s32 %s12, 1
        %s193 = smul.u32 2, %s23
        %p194 = scmp.lt.s32.totalorder %s22, 1
        %s195 = scalar_select %p194, %s22, 1
        %p196 = scmp.lt.s32.totalorder %s193, 1
        %s197 = scalar_select %p196, %s193, 1
        %s198 = smul.addr %s195, 8
        %s199 = sadd.s32 %s197, %s198
        %s200 = smul.addr %s199, 8
        %s201 = scalar_lea.vmem %s0, %s200
        %p202 = pneg %p59
        %p203 = pneg %p56
        %p204 = scmp.lt.s32.totalorder %s24, 0
        %s205 = scalar_select %p204, %s24, 0
        %s206 = smul.addr %s205, 8
        %s207 = scalar_lea.vmem %s1, %s206
        %p208 = pneg %p85
        %p209 = pneg %p82
        %p210 = scmp.lt.s32.totalorder %s24, 0
        %s211 = scalar_select %p210, %s24, 0
        %s212 = scalar_lea.vmem %s2, %s211
        %p213 = pneg %p111
        %p214 = pneg %p108
        %p215 = pneg %p141
        %p216 = pneg %p138
        %s217 = sand.u32 %s128, 1
        %s218 = scalar_lea.sflag [#allocation3], %s217
        %s219 = sand.u32 %s128, 1
        %s220 = smul.addr %s219, 256
        %s221 = scalar_lea.vmem [#allocation2], %s220
        %s222 = smul.u32 2, %s23
        %p223 = scmp.lt.s32.totalorder %s22, 1
        %s224 = scalar_select %p223, %s22, 1
        %p225 = scmp.lt.s32.totalorder %s222, 1
        %s226 = scalar_select %p225, %s222, 1
        %s227 = smul.addr %s224, 8
        %s228 = sadd.s32 %s226, %s227
        %s229 = smul.addr %s228, 8
        %s230 = scalar_lea.vmem %s0, %s229
        %s231 = smul.u32 2, %s23
        %p232 = scmp.lt.s32.totalorder %s24, 0
        %s233 = scalar_select %p232, %s24, 0
        %s234 = smul.addr %s233, 8
        %s235 = scalar_lea.vmem %s1, %s234
        %p236 = scmp.lt.s32.totalorder %s24, 0
        %s237 = scalar_select %p236, %s24, 0
        %s238 = scalar_lea.vmem %s2, %s237
        %s239 = smul.u32 32, %s23
        %v240 = vld [vmem:[%s230] sm:$0xff]
        %v241 = vld [vmem:[%s230 + $0x8] sm:$0xff]
        %v242 = vld [vmem:[%s230 + $0x10] sm:$0xff]
        %v243 = vld [vmem:[%s230 + $0x18] sm:$0xff]
        %v244 = vld [vmem:[%s230 + $0x20] sm:$0xff]
        %v245 = vld [vmem:[%s230 + $0x28] sm:$0xff]
        %v246 = vld [vmem:[%s230 + $0x30] sm:$0xff]
        %v247 = vld [vmem:[%s230 + $0x38] sm:$0xff]
        %v248 = vld [vmem:[%s235] sm:$0xff]
        %v249 = vld [vmem:[%s235 + $0x8] sm:$0xff]
        %v250 = vld [vmem:[%s235 + $0x10] sm:$0xff]
        %v251 = vld [vmem:[%s235 + $0x18] sm:$0xff]
        %v252 = vld [vmem:[%s238] sm:$0x1]
        %v254 = vlaneseq
        %v255 = vshrl.u32 %v254, 7
        %v256 = vsub.s32 0, %v255
        %v257 = vrot.slane %v252, %v256
        %259 = vxpose.xlu0.b32.start [1/16] %v240, 128
        %260 = vxpose.xlu0.b32.cont [2/16] %v242, 128
        %261 = vxpose.xlu0.b32.cont [3/16] %v244, 128
        %262 = vxpose.xlu0.b32.cont [4/16] %v246, 128
        %263 = vxpose.xlu0.b32.cont [5/16] 0.0, 128
        %264 = vxpose.xlu0.b32.cont [6/16] 0.0, 128
        %265 = vxpose.xlu0.b32.cont [7/16] 0.0, 128
        %266 = vxpose.xlu0.b32.cont [8/16] 0.0, 128
        %267 = vxpose.xlu0.b32.cont [9/16] 0.0, 128
        %268 = vxpose.xlu0.b32.cont [10/16] 0.0, 128
        %269 = vxpose.xlu0.b32.cont [11/16] 0.0, 128
        %270 = vxpose.xlu0.b32.cont [12/16] 0.0, 128
        %271 = vxpose.xlu0.b32.cont [13/16] 0.0, 128
        %272 = vxpose.xlu0.b32.cont [14/16] 0.0, 128
        %273 = vxpose.xlu0.b32.cont [15/16] 0.0, 128
        %274 = vxpose.xlu0.b32.end [16/16] 0.0, 128
        %v275 = vpop.trf.xlu0
        %v276 = vpop.trf.xlu0
        %v277 = vpop.trf.xlu0
        %v278 = vpop.trf.xlu0
        %v279 = vpop.trf.xlu0
        %v280 = vpop.trf.xlu0
        %v281 = vpop.trf.xlu0
        %v282 = vpop.trf.xlu0
        %v283 = vpop.trf.xlu0
        %v284 = vpop.trf.xlu0
        %v285 = vpop.trf.xlu0
        %v286 = vpop.trf.xlu0
        %v287 = vpop.trf.xlu0
        %v288 = vpop.trf.xlu0
        %v289 = vpop.trf.xlu0
        %v290 = vpop.trf.xlu0
        %291 = vxpose.xlu0.b32.start [1/16] %v241, 128
        %292 = vxpose.xlu0.b32.cont [2/16] %v243, 128
        %293 = vxpose.xlu0.b32.cont [3/16] %v245, 128
        %294 = vxpose.xlu0.b32.cont [4/16] %v247, 128
        %295 = vxpose.xlu0.b32.cont [5/16] 0.0, 128
        %296 = vxpose.xlu0.b32.cont [6/16] 0.0, 128
        %297 = vxpose.xlu0.b32.cont [7/16] 0.0, 128
        %298 = vxpose.xlu0.b32.cont [8/16] 0.0, 128
        %299 = vxpose.xlu0.b32.cont [9/16] 0.0, 128
        %300 = vxpose.xlu0.b32.cont [10/16] 0.0, 128
        %301 = vxpose.xlu0.b32.cont [11/16] 0.0, 128
        %302 = vxpose.xlu0.b32.cont [12/16] 0.0, 128
        %303 = vxpose.xlu0.b32.cont [13/16] 0.0, 128
        %304 = vxpose.xlu0.b32.cont [14/16] 0.0, 128
        %305 = vxpose.xlu0.b32.cont [15/16] 0.0, 128
        %306 = vxpose.xlu0.b32.end [16/16] 0.0, 128
        %v307 = vpop.trf.xlu0
        %v308 = vpop.trf.xlu0
        %v309 = vpop.trf.xlu0
        %v310 = vpop.trf.xlu0
        %v311 = vpop.trf.xlu0
        %v312 = vpop.trf.xlu0
        %v313 = vpop.trf.xlu0
        %v314 = vpop.trf.xlu0
        %v315 = vpop.trf.xlu0
        %v316 = vpop.trf.xlu0
        %v317 = vpop.trf.xlu0
        %v318 = vpop.trf.xlu0
        %v319 = vpop.trf.xlu0
        %v320 = vpop.trf.xlu0
        %v321 = vpop.trf.xlu0
        %v322 = vpop.trf.xlu0
        %vm323 = vcmask 261120
        %v325 = vsel %vm323, %v275, 0
        %v328 = vsel %vm323, %v276, 0
        %v331 = vsel %vm323, %v277, 0
        %v334 = vsel %vm323, %v278, 0
        %v337 = vsel %vm323, %v279, 0
        %v340 = vsel %vm323, %v280, 0
        %v343 = vsel %vm323, %v281, 0
        %v346 = vsel %vm323, %v282, 0
        %v349 = vsel %vm323, %v283, 0
        %v352 = vsel %vm323, %v284, 0
        %v355 = vsel %vm323, %v285, 0
        %v358 = vsel %vm323, %v286, 0
        %v361 = vsel %vm323, %v287, 0
        %v364 = vsel %vm323, %v288, 0
        %v367 = vsel %vm323, %v289, 0
        %v370 = vsel %vm323, %v290, 0
        %v373 = vsel %vm323, %v307, 0
        %v376 = vsel %vm323, %v308, 0
        %v379 = vsel %vm323, %v309, 0
        %v382 = vsel %vm323, %v310, 0
        %v385 = vsel %vm323, %v311, 0
        %v388 = vsel %vm323, %v312, 0
        %v391 = vsel %vm323, %v313, 0
        %v394 = vsel %vm323, %v314, 0
        %v397 = vsel %vm323, %v315, 0
        %v400 = vsel %vm323, %v316, 0
        %v403 = vsel %vm323, %v317, 0
        %v406 = vsel %vm323, %v318, 0
        %v409 = vsel %vm323, %v319, 0
        %v412 = vsel %vm323, %v320, 0
        %v415 = vsel %vm323, %v321, 0
        %v418 = vsel %vm323, %v322, 0
        %420 = vmatprep.subr.mxu0 0.0
        %421 = vmatpush1.msra.mxu0 %v248
        %422 = vmatprep.subr.mxu0 0.0
        %423 = vmatpush1.msra.mxu0 %v249
        %424 = vmatprep.subr.mxu0 0.0
        %425 = vmatpush1.msra.mxu0 %v250
        %426 = vmatprep.subr.mxu0 0.0
        %427 = vmatpush1.msra.mxu0 %v251
        %428 = vmatprep.subr.mxu0 0.0
        %429 = vmatpush1.msra.mxu0 0.0
        %430 = vmatprep.subr.mxu0 0.0
        %431 = vmatpush1.msra.mxu0 0.0
        %432 = vmatprep.subr.mxu0 0.0
        %433 = vmatpush1.msra.mxu0 0.0
        %434 = vmatprep.subr.mxu0 0.0
        %435 = vmatpush1.msra.mxu0 0.0
        %436 = vmatprep.subr.mxu0 0.0
        %437 = vmatpush1.msra.mxu0 0.0
        %438 = vmatprep.subr.mxu0 0.0
        %439 = vmatpush1.msra.mxu0 0.0
        %440 = vmatprep.subr.mxu0 0.0
        %441 = vmatpush1.msra.mxu0 0.0
        %442 = vmatprep.subr.mxu0 0.0
        %443 = vmatpush1.msra.mxu0 0.0
        %444 = vmatprep.subr.mxu0 0.0
        %445 = vmatpush1.msra.mxu0 0.0
        %446 = vmatprep.subr.mxu0 0.0
        %447 = vmatpush1.msra.mxu0 0.0
        %448 = vmatprep.subr.mxu0 0.0
        %449 = vmatpush1.msra.mxu0 0.0
        %450 = vmatprep.subr.mxu0 0.0
        %451 = vmatpush1.msra.mxu0 0.0
        %452 = vmatprep.subr.mxu0 0.0
        %453 = vmatpush1.msra.mxu0 0.0
        %454 = vmatprep.subr.mxu0 0.0
        %455 = vmatpush1.msra.mxu0 0.0
        %456 = vmatprep.subr.mxu0 0.0
        %457 = vmatpush1.msra.mxu0 0.0
        %458 = vmatprep.subr.mxu0 0.0
        %459 = vmatpush1.msra.mxu0 0.0
        %460 = vmatprep.subr.mxu0 0.0
        %461 = vmatpush1.msra.mxu0 0.0
        %462 = vmatprep.subr.mxu0 0.0
        %463 = vmatpush1.msra.mxu0 0.0
        %464 = vmatprep.subr.mxu0 0.0
        %465 = vmatpush1.msra.mxu0 0.0
        %466 = vmatprep.subr.mxu0 0.0
        %467 = vmatpush1.msra.mxu0 0.0
        %468 = vmatprep.subr.mxu0 0.0
        %469 = vmatpush1.msra.mxu0 0.0
        %470 = vmatprep.subr.mxu0 0.0
        %471 = vmatpush1.msra.mxu0 0.0
        %472 = vmatprep.subr.mxu0 0.0
        %473 = vmatpush1.msra.mxu0 0.0
        %474 = vmatprep.subr.mxu0 0.0
        %475 = vmatpush1.msra.mxu0 0.0
        %476 = vmatprep.subr.mxu0 0.0
        %477 = vmatpush1.msra.mxu0 0.0
        %478 = vmatprep.subr.mxu0 0.0
        %479 = vmatpush1.msra.mxu0 0.0
        %480 = vmatprep.subr.mxu0 0.0
        %481 = vmatpush1.msra.mxu0 0.0
        %482 = vmatprep.subr.mxu0 0.0
        %483 = vmatpush1.msra.mxu0 0.0
        %484 = vmatprep.mubr.f32.mxu0 0.0
        %485 = vmatmul.mubr.f32.gmra.mrb[0].mxu0 %v325
        %v486 = vpop.f32.mrb[0].mxu0
        %v487 = vadd.f32 %v257, %v486
        %v488 = vpop.f32.mrb[0].mxu0
        %489 = vmatprep.mubr.f32.mxu0 0.0
        %490 = vmatmul.mubr.f32.gmra.mrb[0].mxu0 %v328
        %v491 = vpop.f32.mrb[0].mxu0
        %v492 = vadd.f32 %v257, %v491
        %v493 = vpop.f32.mrb[0].mxu0
        %494 = vmatprep.mubr.f32.mxu0 0.0
        %495 = vmatmul.mubr.f32.gmra.mrb[0].mxu0 %v331
        %v496 = vpop.f32.mrb[0].mxu0
        %v497 = vadd.f32 %v257, %v496
        %v498 = vpop.f32.mrb[0].mxu0
        %499 = vmatprep.mubr.f32.mxu0 0.0
        %500 = vmatmul.mubr.f32.gmra.mrb[0].mxu0 %v334
        %v501 = vpop.f32.mrb[0].mxu0
        %v502 = vadd.f32 %v257, %v501
        %v503 = vpop.f32.mrb[0].mxu0
        %504 = vmatprep.mubr.f32.mxu0 0.0
        %505 = vmatmul.mubr.f32.gmra.mrb[0].mxu0 %v337
        %v506 = vpop.f32.mrb[0].mxu0
        %v507 = vadd.f32 %v257, %v506
        %v508 = vpop.f32.mrb[0].mxu0
        %509 = vmatprep.mubr.f32.mxu0 0.0
        %510 = vmatmul.mubr.f32.gmra.mrb[0].mxu0 %v340
        %v511 = vpop.f32.mrb[0].mxu0
        %v512 = vadd.f32 %v257, %v511
        %v513 = vpop.f32.mrb[0].mxu0
        %514 = vmatprep.mubr.f32.mxu0 0.0
        %515 = vmatmul.mubr.f32.gmra.mrb[0].mxu0 %v343
        %v516 = vpop.f32.mrb[0].mxu0
        %v517 = vadd.f32 %v257, %v516
        %v518 = vpop.f32.mrb[0].mxu0
        %519 = vmatprep.mubr.f32.mxu0 0.0
        %520 = vmatmul.mubr.f32.gmra.mrb[0].mxu0 %v346
        %v521 = vpop.f32.mrb[0].mxu0
        %v522 = vadd.f32 %v257, %v521
        %v523 = vpop.f32.mrb[0].mxu0
        %524 = vmatprep.mubr.f32.mxu0 0.0
        %525 = vmatmul.mubr.f32.gmra.mrb[0].mxu0 %v349
        %v526 = vpop.f32.mrb[0].mxu0
        %v527 = vadd.f32 %v257, %v526
        %v528 = vpop.f32.mrb[0].mxu0
        %529 = vmatprep.mubr.f32.mxu0 0.0
        %530 = vmatmul.mubr.f32.gmra.mrb[0].mxu0 %v352
        %v531 = vpop.f32.mrb[0].mxu0
        %v532 = vadd.f32 %v257, %v531
        %v533 = vpop.f32.mrb[0].mxu0
        %534 = vmatprep.mubr.f32.mxu0 0.0
        %535 = vmatmul.mubr.f32.gmra.mrb[0].mxu0 %v355
        %v536 = vpop.f32.mrb[0].mxu0
        %v537 = vadd.f32 %v257, %v536
        %v538 = vpop.f32.mrb[0].mxu0
        %539 = vmatprep.mubr.f32.mxu0 0.0
        %540 = vmatmul.mubr.f32.gmra.mrb[0].mxu0 %v358
        %v541 = vpop.f32.mrb[0].mxu0
        %v542 = vadd.f32 %v257, %v541
        %v543 = vpop.f32.mrb[0].mxu0
        %544 = vmatprep.mubr.f32.mxu0 0.0
        %545 = vmatmul.mubr.f32.gmra.mrb[0].mxu0 %v361
        %v546 = vpop.f32.mrb[0].mxu0
        %v547 = vadd.f32 %v257, %v546
        %v548 = vpop.f32.mrb[0].mxu0
        %549 = vmatprep.mubr.f32.mxu0 0.0
        %550 = vmatmul.mubr.f32.gmra.mrb[0].mxu0 %v364
        %v551 = vpop.f32.mrb[0].mxu0
        %v552 = vadd.f32 %v257, %v551
        %v553 = vpop.f32.mrb[0].mxu0
        %554 = vmatprep.mubr.f32.mxu0 0.0
        %555 = vmatmul.mubr.f32.gmra.mrb[0].mxu0 %v367
        %v556 = vpop.f32.mrb[0].mxu0
        %v557 = vadd.f32 %v257, %v556
        %v558 = vpop.f32.mrb[0].mxu0
        %559 = vmatprep.mubr.f32.mxu0 0.0
        %560 = vmatmul.mubr.f32.gmra.mrb[0].mxu0 %v370
        %v561 = vpop.f32.mrb[0].mxu0
        %v562 = vadd.f32 %v257, %v561
        %v563 = vpop.f32.mrb[0].mxu0
        %564 = vmatprep.mubr.f32.mxu0 0.0
        %565 = vmatmul.mubr.f32.gmra.mrb[0].mxu0 %v373
        %v566 = vpop.f32.mrb[0].mxu0
        %v567 = vadd.f32 %v257, %v566
        %v568 = vpop.f32.mrb[0].mxu0
        %569 = vmatprep.mubr.f32.mxu0 0.0
        %570 = vmatmul.mubr.f32.gmra.mrb[0].mxu0 %v376
        %v571 = vpop.f32.mrb[0].mxu0
        %v572 = vadd.f32 %v257, %v571
        %v573 = vpop.f32.mrb[0].mxu0
        %574 = vmatprep.mubr.f32.mxu0 0.0
        %575 = vmatmul.mubr.f32.gmra.mrb[0].mxu0 %v379
        %v576 = vpop.f32.mrb[0].mxu0
        %v577 = vadd.f32 %v257, %v576
        %v578 = vpop.f32.mrb[0].mxu0
        %579 = vmatprep.mubr.f32.mxu0 0.0
        %580 = vmatmul.mubr.f32.gmra.mrb[0].mxu0 %v382
        %v581 = vpop.f32.mrb[0].mxu0
        %v582 = vadd.f32 %v257, %v581
        %v583 = vpop.f32.mrb[0].mxu0
        %584 = vmatprep.mubr.f32.mxu0 0.0
        %585 = vmatmul.mubr.f32.gmra.mrb[0].mxu0 %v385
        %v586 = vpop.f32.mrb[0].mxu0
        %v587 = vadd.f32 %v257, %v586
        %v588 = vpop.f32.mrb[0].mxu0
        %589 = vmatprep.mubr.f32.mxu0 0.0
        %590 = vmatmul.mubr.f32.gmra.mrb[0].mxu0 %v388
        %v591 = vpop.f32.mrb[0].mxu0
        %v592 = vadd.f32 %v257, %v591
        %v593 = vpop.f32.mrb[0].mxu0
        %594 = vmatprep.mubr.f32.mxu0 0.0
        %595 = vmatmul.mubr.f32.gmra.mrb[0].mxu0 %v391
        %v596 = vpop.f32.mrb[0].mxu0
        %v597 = vadd.f32 %v257, %v596
        %v598 = vpop.f32.mrb[0].mxu0
        %599 = vmatprep.mubr.f32.mxu0 0.0
        %600 = vmatmul.mubr.f32.gmra.mrb[0].mxu0 %v394
        %v601 = vpop.f32.mrb[0].mxu0
        %v602 = vadd.f32 %v257, %v601
        %v603 = vpop.f32.mrb[0].mxu0
        %604 = vmatprep.mubr.f32.mxu0 0.0
        %605 = vmatmul.mubr.f32.gmra.mrb[0].mxu0 %v397
        %v606 = vpop.f32.mrb[0].mxu0
        %v607 = vadd.f32 %v257, %v606
        %v608 = vpop.f32.mrb[0].mxu0
        %609 = vmatprep.mubr.f32.mxu0 0.0
        %610 = vmatmul.mubr.f32.gmra.mrb[0].mxu0 %v400
        %v611 = vpop.f32.mrb[0].mxu0
        %v612 = vadd.f32 %v257, %v611
        %v613 = vpop.f32.mrb[0].mxu0
        %614 = vmatprep.mubr.f32.mxu0 0.0
        %615 = vmatmul.mubr.f32.gmra.mrb[0].mxu0 %v403
        %v616 = vpop.f32.mrb[0].mxu0
        %v617 = vadd.f32 %v257, %v616
        %v618 = vpop.f32.mrb[0].mxu0
        %619 = vmatprep.mubr.f32.mxu0 0.0
        %620 = vmatmul.mubr.f32.gmra.mrb[0].mxu0 %v406
        %v621 = vpop.f32.mrb[0].mxu0
        %v622 = vadd.f32 %v257, %v621
        %v623 = vpop.f32.mrb[0].mxu0
        %624 = vmatprep.mubr.f32.mxu0 0.0
        %625 = vmatmul.mubr.f32.gmra.mrb[0].mxu0 %v409
        %v626 = vpop.f32.mrb[0].mxu0
        %v627 = vadd.f32 %v257, %v626
        %v628 = vpop.f32.mrb[0].mxu0
        %629 = vmatprep.mubr.f32.mxu0 0.0
        %630 = vmatmul.mubr.f32.gmra.mrb[0].mxu0 %v412
        %v631 = vpop.f32.mrb[0].mxu0
        %v632 = vadd.f32 %v257, %v631
        %v633 = vpop.f32.mrb[0].mxu0
        %634 = vmatprep.mubr.f32.mxu0 0.0
        %635 = vmatmul.mubr.f32.gmra.mrb[0].mxu0 %v415
        %v636 = vpop.f32.mrb[0].mxu0
        %v637 = vadd.f32 %v257, %v636
        %v638 = vpop.f32.mrb[0].mxu0
        %639 = vmatprep.mubr.f32.mxu0 0.0
        %640 = vmatmul.mubr.f32.gmra.mrb[0].mxu0 %v418
        %v641 = vpop.f32.mrb[0].mxu0
        %v642 = vadd.f32 %v257, %v641
        %v643 = vpop.f32.mrb[0].mxu0
        %644 = vdwg.mxu0
        %645 = vst [vmem:[%s221] sm:$0xff] %v487
        %646 = vst [vmem:[%s221 + $0x8] sm:$0xff] %v492
        %647 = vst [vmem:[%s221 + $0x10] sm:$0xff] %v497
        %648 = vst [vmem:[%s221 + $0x18] sm:$0xff] %v502
        %649 = vst [vmem:[%s221 + $0x20] sm:$0xff] %v507
        %650 = vst [vmem:[%s221 + $0x28] sm:$0xff] %v512
        %651 = vst [vmem:[%s221 + $0x30] sm:$0xff] %v517
        %652 = vst [vmem:[%s221 + $0x38] sm:$0xff] %v522
        %653 = vst [vmem:[%s221 + $0x40] sm:$0xff] %v527
        %654 = vst [vmem:[%s221 + $0x48] sm:$0xff] %v532
        %655 = vst [vmem:[%s221 + $0x50] sm:$0xff] %v537
        %656 = vst [vmem:[%s221 + $0x58] sm:$0xff] %v542
        %657 = vst [vmem:[%s221 + $0x60] sm:$0xff] %v547
        %658 = vst [vmem:[%s221 + $0x68] sm:$0xff] %v552
        %659 = vst [vmem:[%s221 + $0x70] sm:$0xff] %v557
        %660 = vst [vmem:[%s221 + $0x78] sm:$0xff] %v562
        %661 = vst [vmem:[%s221 + $0x80] sm:$0xff] %v567
        %662 = vst [vmem:[%s221 + $0x88] sm:$0xff] %v572
        %663 = vst [vmem:[%s221 + $0x90] sm:$0xff] %v577
        %664 = vst [vmem:[%s221 + $0x98] sm:$0xff] %v582
        %665 = vst [vmem:[%s221 + $0xa0] sm:$0xff] %v587
        %666 = vst [vmem:[%s221 + $0xa8] sm:$0xff] %v592
        %667 = vst [vmem:[%s221 + $0xb0] sm:$0xff] %v597
        %668 = vst [vmem:[%s221 + $0xb8] sm:$0xff] %v602
        %669 = vst [vmem:[%s221 + $0xc0] sm:$0xff] %v607
        %670 = vst [vmem:[%s221 + $0xc8] sm:$0xff] %v612
        %671 = vst [vmem:[%s221 + $0xd0] sm:$0xff] %v617
        %672 = vst [vmem:[%s221 + $0xd8] sm:$0xff] %v622
        %673 = vst [vmem:[%s221 + $0xe0] sm:$0xff] %v627
        %674 = vst [vmem:[%s221 + $0xe8] sm:$0xff] %v632
        %675 = vst [vmem:[%s221 + $0xf0] sm:$0xff] %v637
        %676 = vst [vmem:[%s221 + $0xf8] sm:$0xff] %v642
        %s677 = sand.u32 %s128, 1
        %s678 = scalar_lea.sflag [#allocation3], %s677
        %s679 = sand.u32 %s128, 1
        %s680 = smul.addr %s679, 256
        %s681 = scalar_lea.vmem [#allocation2], %s680
        // Predicated region
        $region33: #{mlp_forward.1} parent=31 // pred_check
          %p682 = pneg %p138
        $region34: #{mlp_forward.1} parent=31 // pred_check_branch
          %684 = sbr.rel (%p682) target = $region36
        $region35: #{mlp_forward.1} parent=31 // pred_region
          %s685 = smul.u32 32, %s23
          %s687 = ssub.s32 4096, 4096
          %688 = vsyncadd %s678, %s687
          %s689 = sadd.s32 %s24, %s685
          %s690 = smul.addr %s22, 32
          %s691 = sadd.s32 %s689, %s690
          %s692 = smul.addr %s691, 128
          %s693 = scalar_lea.hbm %s3, %s692
          %s694 = sshll.u32 %s681, 4
          %s695 = int_to_ptr.vmem [resolvable:$true] %s694
          %700 = dma.vmem_to_hbm [thread:$0]  %s695, 4096, %s693, %s678, 128, 128, 8
        $region36: #{mlp_forward.1} parent=31 // pred_fallthru
          _
      $region32: #{mlp_forward.1} parent=5 // pred_fallthru
        _
      %p701 = scmp.le.s32.totalorder 2, %s12
      // Predicated region
      $region37: #{mlp_forward.1} parent=5 // pred_check
        %p702 = pneg %p701
      $region38: #{mlp_forward.1} parent=5 // pred_check_branch
        %704 = sbr.rel (%p702) target = $region40
      $region39: #{mlp_forward.1} parent=5 // pred_region
        %s705 = ssub.s32 %s12, 2
        // Predicated region
        $region41: #{mlp_forward.1} parent=39 // pred_check
          %p706 = pneg %p144
        $region42: #{mlp_forward.1} parent=39 // pred_check_branch
          %708 = sbr.rel (%p706) target = $region44
        $region43: #{mlp_forward.1} parent=39 // pred_region
          %s709 = sand.u32 %s129, 1
          %s710 = scalar_lea.sflag [#allocation3], %s709
          %s711 = sand.u32 %s129, 1
          %s712 = smul.addr %s711, 256
          %s713 = scalar_lea.vmem [#allocation2], %s712
          %714 = dma.done %s710, 4096
        $region44: #{mlp_forward.1} parent=39 // pred_fallthru
          _
      $region40: #{mlp_forward.1} parent=5 // pred_fallthru
        _
    $region6: #{mlp_forward.1} parent=1 // loop_footer
      %s16 = sadd.s32 1, %s12
    $region7: #{mlp_forward.1} parent=1 // loop_footer_branch
      %11 = sbr.rel target = $region3
    $region8: #{mlp_forward.1} parent=1 // loop_exit
      _
    %715 = vsyncpa [#allocation3], 1
    %s716 = scalar_lea.sflag [#allocation3], 1
    %717 = vsyncpa %s716, 1

</llo_original>
